<compile_context>
chip_gen: v5e
topology: v5e:2x2
jax: 0.10.0
libtpu: 0.0.40
codegen_flags: <defaults>
</compile_context>

<pallas_src>
import functools
import math

import jax
import jax.numpy as jnp
from jax.experimental import pallas as pl
from jax.experimental.pallas import tpu as pltpu


def _cdiv(a, b):
    return -(-a // b)


def _round_up(a, b):
    return _cdiv(a, b) * b


def _matmul_kernel(x_ref, w_ref, o_ref, *scratch, multi_k, acc_in_out):
    part = jnp.dot(x_ref[...], w_ref[...], preferred_element_type=jnp.float32)

    if not multi_k:
        # Single-K specialization: no accumulator, no phases.
        o_ref[...] = part.astype(o_ref.dtype)
        return

    if acc_in_out:
        # f32 output: accumulate straight into the resident output block.
        @pl.when(pl.program_id(2) == 0)
        def _():
            o_ref[...] = jnp.zeros_like(o_ref)

        o_ref[...] += part
    else:
        acc_ref = scratch[0]

        @pl.when(pl.program_id(2) == 0)
        def _():
            acc_ref[...] = jnp.zeros_like(acc_ref)

        acc_ref[...] += part

        @pl.when(pl.program_id(2) == pl.num_programs(2) - 1)
        def _():
            o_ref[...] = acc_ref[...].astype(o_ref.dtype)


class MatrixMultiply:
    """JAX/Pallas port of reformer_pytorch.MatrixMultiply (forward only).

    The normalize / transpose of the construction-time-fixed tensor is folded
    into an effective (K, N) weight once at __init__ (one-time HBM pass), so the
    per-call kernel is a plain tiled matmul.
    """

    _TM_MAX = 512
    _TN_MAX = 1024
    _TK_MAX = 1024

    def __init__(self, tensor, transpose=False, normalize=False, compute_dtype=None):
        self.transpose = transpose
        self.normalize = normalize
        self._param_dtype = tensor.dtype
        self._compute_dtype = compute_dtype

        w = tensor
        if normalize:
            # F.normalize(tensor, dim=-1): v / max(||v||_2, eps), eps = 1e-12
            wf = w.astype(jnp.float32)
            norm = jnp.sqrt(jnp.sum(wf * wf, axis=-1, keepdims=True))
            w = (wf / jnp.maximum(norm, 1e-12)).astype(tensor.dtype)
        if transpose:
            w = w.T  # one-time; tensor is fixed at construction
        if compute_dtype is not None:
            w = w.astype(compute_dtype)

        K, N = w.shape
        self.K, self.N = K, N

        # --- static tile plan for the weight-side dims (done once) ---
        n_j = _cdiv(N, self._TN_MAX)
        tn = N if n_j == 1 else _round_up(_cdiv(N, n_j), 128)
        n_k = _cdiv(K, self._TK_MAX)
        tk = K if n_k == 1 else _round_up(_cdiv(K, n_k), 128)
        Np, Kp = tn * n_j, tk * n_k

        if (Kp, Np) != (K, N):
            # One-time zero-pad (only when N or K exceeds a single max tile).
            w = jnp.pad(w, ((0, Kp - K), (0, Np - N)))

        self.w = w
        self.tn, self.tk = tn, tk
        self.Np, self.Kp = Np, Kp
        self.n_j, self.n_k = n_j, n_k

    def __call__(self, x):
        lead, K = x.shape[:-1], x.shape[-1]
        assert K == self.K, (x.shape, (self.K, self.N))
        M = int(math.prod(lead)) if lead else 1
        x2d = x.reshape(M, K)

        out_dtype = jnp.result_type(x.dtype, self._param_dtype)
        if self._compute_dtype is not None:
            x2d = x2d.astype(self._compute_dtype)

        # --- per-call tile plan for M ---
        n_i = _cdiv(M, self._TM_MAX)
        if n_i == 1 and self.n_j == 1 and M >= 512:
            # Keep >= 2 parallel blocks for large single-block problems so a
            # 2-TensorCore chip (v7x) shards the grid across both cores.
            n_i = 2
        tm = M if n_i == 1 else _round_up(_cdiv(M, n_i), 8)
        Mp = tm * n_i

        tn, tk, Np, Kp = self.tn, self.tk, self.Np, self.Kp
        if (Mp, Kp) != (M, K):
            x2d = jnp.pad(x2d, ((0, Mp - M), (0, Kp - K)))

        multi_k = self.n_k > 1
        acc_in_out = multi_k and out_dtype == jnp.float32

        x_item = jnp.dtype(x2d.dtype).itemsize
        w_item = jnp.dtype(self.w.dtype).itemsize
        o_item = jnp.dtype(out_dtype).itemsize
        cost = pl.CostEstimate(
            flops=2 * M * self.N * K,
            transcendentals=0,
            bytes_accessed=M * K * x_item + K * self.N * w_item + M * self.N * o_item,
        )

        # VMEM footprint: double-buffered inputs + output (+ optional acc).
        block_bytes = 2 * (tm * tk * x_item + tk * tn * w_item) + 2 * tm * tn * o_item
        if multi_k and not acc_in_out:
            block_bytes += tm * tn * 4
        # Explicit limit so the enlarged tiles also fit v5e's 16 MiB scoped
        # default (physical VMEM >= 64 MiB on every listed generation).
        vmem_limit = min(48 << 20, max(32 << 20, int(block_bytes * 1.25)))

        if multi_k:
            grid = (n_i, self.n_j, self.n_k)
            in_specs = [
                pl.BlockSpec((tm, tk), lambda i, j, k: (i, k)),
                pl.BlockSpec((tk, tn), lambda i, j, k: (k, j)),
            ]
            out_specs = pl.BlockSpec((tm, tn), lambda i, j, k: (i, j))
            scratch = [] if acc_in_out else [pltpu.VMEM((tm, tn), jnp.float32)]
            semantics = ("parallel", "parallel", "arbitrary")
        else:
            grid = (n_i, self.n_j)
            in_specs = [
                pl.BlockSpec((tm, tk), lambda i, j: (i, 0)),
                pl.BlockSpec((tk, tn), lambda i, j: (0, j)),
            ]
            out_specs = pl.BlockSpec((tm, tn), lambda i, j: (i, j))
            scratch = []
            semantics = ("parallel", "parallel")

        kernel = functools.partial(
            _matmul_kernel, multi_k=multi_k, acc_in_out=acc_in_out
        )

        out = pl.pallas_call(
            kernel,
            out_shape=jax.ShapeDtypeStruct((Mp, Np), out_dtype),
            grid_spec=pltpu.PrefetchScalarGridSpec(
                num_scalar_prefetch=0,
                grid=grid,
                in_specs=in_specs,
                out_specs=out_specs,
                scratch_shapes=scratch,
            ),
            compiler_params=pltpu.CompilerParams(
                dimension_semantics=semantics,
                vmem_limit_bytes=vmem_limit,
            ),
            cost_estimate=cost,
        )(x2d, self.w)

        if (Mp, Np) != (M, self.N):
            out = out[:M, : self.N]
        return out.reshape(*lead, self.N)


def _normalize_ref(t):
    tf = t.astype(jnp.float32)
    n = jnp.sqrt(jnp.sum(tf * tf, axis=-1, keepdims=True))
    return tf / jnp.maximum(n, 1e-12)


if __name__ == "__main__":
    key = jax.random.PRNGKey(0)
    kx, kw, kw2, kw3, kw4 = jax.random.split(key, 5)

    # 1) Typical Reformer usage: tied output projection -> tensor is the embedding
    #    weight (V, D), transpose=True, normalize=True.
    B, S, D, V = 2, 8, 128, 256
    x = jax.random.normal(kx, (B, S, D), dtype=jnp.float32)
    weight = jax.random.normal(kw, (V, D), dtype=jnp.float32)

    mm = MatrixMultiply(weight, transpose=True, normalize=True)
    out = jax.block_until_ready(mm(x))
    ref = x @ _normalize_ref(weight).T
    assert out.shape == (B, S, V)
    assert jnp.allclose(out, ref, atol=1e-4, rtol=1e-4)

    # 2) Plain path: tensor (D, V), no transpose / no normalize.
    weight2 = jax.random.normal(kw2, (D, V), dtype=jnp.float32)
    mm2 = MatrixMultiply(weight2)
    out2 = jax.block_until_ready(mm2(x))
    assert jnp.allclose(out2, x @ weight2, atol=1e-4, rtol=1e-4)

    # 3) Normalize without transpose.
    mm3 = MatrixMultiply(weight2, transpose=False, normalize=True)
    out3 = jax.block_until_ready(mm3(x))
    assert jnp.allclose(out3, x @ _normalize_ref(weight2), atol=1e-4, rtol=1e-4)

    # 4) Ragged shapes, single-K full-dim blocks: no padding needed anywhere.
    B2, S2, D2, V2 = 3, 5, 600, 70
    x4 = jax.random.normal(kx, (B2, S2, D2), dtype=jnp.float32)
    weight4 = jax.random.normal(kw3, (V2, D2), dtype=jnp.float32)
    mm4 = MatrixMultiply(weight4, transpose=True, normalize=True)
    out4 = jax.block_until_ready(mm4(x4))
    ref4 = x4 @ _normalize_ref(weight4).T
    assert out4.shape == (B2, S2, V2)
    assert jnp.allclose(out4, ref4, atol=1e-3, rtol=1e-3)

    # 5) Multi-K path with f32 output: accumulates directly into o_ref.
    M5, K5, V5 = 16, 1100, 64
    x5 = jax.random.normal(kx, (M5, K5), dtype=jnp.float32)
    weight5 = jax.random.normal(kw4, (V5, K5), dtype=jnp.float32)
    mm5 = MatrixMultiply(weight5, transpose=True, normalize=True)
    out5 = jax.block_until_ready(mm5(x5))
    ref5 = x5 @ _normalize_ref(weight5).T
    assert jnp.allclose(out5, ref5, atol=1e-3, rtol=1e-3)

    # 6) Multi-K path with non-f32 output: f32 scratch accumulator.
    x6 = x5.astype(jnp.bfloat16)
    weight6 = jax.random.normal(kw4, (K5, 48), dtype=jnp.bfloat16)
    mm6 = MatrixMultiply(weight6)
    out6 = jax.block_until_ready(mm6(x6))
    ref6 = x6.astype(jnp.float32) @ weight6.astype(jnp.float32)
    assert out6.dtype == jnp.bfloat16
    assert jnp.allclose(out6.astype(jnp.float32), ref6, atol=1.0, rtol=0.1)

    # 7) bf16 compute path (MXU at narrow-dtype rate, f32 accumulation/output).
    mm7 = MatrixMultiply(weight, transpose=True, normalize=True,
                         compute_dtype=jnp.bfloat16)
    out7 = jax.block_until_ready(mm7(x))
    assert out7.dtype == jnp.float32
    assert jnp.allclose(out7, ref, atol=0.5, rtol=0.05)

    print("KERNEL_OK")
</pallas_src>

<mosaic_0001>
module attributes {stable_mosaic.version = 11 : i64} {
  func.func @_matmul_kernel(%arg0: i32, %arg1: i32, %arg2: memref<16x128xf32, #tpu.memory_space<vmem>>, %arg3: memref<128x256xf32, #tpu.memory_space<vmem>>, %arg4: memref<16x256xf32, #tpu.memory_space<vmem>>) attributes {dimension_semantics = [#tpu.dimension_semantics<parallel>, #tpu.dimension_semantics<parallel>], iteration_bounds = array<i64: 1, 1>, scalar_prefetch = 0 : i64, scratch_operands = 0 : i64, tpu.core_type = #tpu.core_type<tc>, window_params = [{transform_indices = @transform_0, window_bounds = array<i64: 16, 128>}, {transform_indices = @transform_1, window_bounds = array<i64: 128, 256>}, {transform_indices = @transform_2, window_bounds = array<i64: 16, 256>}]} {
    %c0 = arith.constant 0 : index
    %c0_0 = arith.constant 0 : index
    %0 = vector.load %arg2[%c0, %c0_0] : memref<16x128xf32, #tpu.memory_space<vmem>>, vector<16x128xf32>
    %c0_1 = arith.constant 0 : index
    %c0_2 = arith.constant 0 : index
    %1 = vector.load %arg3[%c0_1, %c0_2] : memref<128x256xf32, #tpu.memory_space<vmem>>, vector<128x256xf32>
    %cst = arith.constant dense<0.000000e+00> : vector<16x256xf32>
    %2 = tpu.matmul %0, %1, %cst {dimension_numbers = #tpu.dot_dimension_numbers<[1], [0], [0], [1], [0, 0, 1, 1], [], []>} : vector<16x128xf32>, vector<128x256xf32>, vector<16x256xf32> -> vector<16x256xf32>
    %c0_3 = arith.constant 0 : index
    %c0_4 = arith.constant 0 : index
    %3 = vector.load %arg4[%c0_3, %c0_4] : memref<16x256xf32, #tpu.memory_space<vmem>>, vector<16x256xf32>
    tpu.vector_store %arg4[%c0_3, %c0_4], %2 {strides = array<i32>} : memref<16x256xf32, #tpu.memory_space<vmem>>, vector<16x256xf32>,
    return
  }
  func.func @transform_0(%arg0: i32, %arg1: i32) -> (i32, i32) {
    %c0_i32 = arith.constant 0 : i32
    %c0_i32_0 = arith.constant 0 : i32
    return %arg0, %c0_i32 : i32, i32
  }
  func.func @transform_1(%arg0: i32, %arg1: i32) -> (i32, i32) {
    %c0_i32 = arith.constant 0 : i32
    %c0_i32_0 = arith.constant 0 : i32
    return %c0_i32, %arg1 : i32, i32
  }
  func.func @transform_2(%arg0: i32, %arg1: i32) -> (i32, i32) {
    %c0_i32 = arith.constant 0 : i32
    return %arg0, %arg1 : i32, i32
  }
}

</mosaic_0001>

<llo_original>
// kernel: tpu_custom_call.1
$region0: #{tpu_custom_call.1}
  #allocation0 [shape = 'u32[]', space=smem, size = 0x4, offset = 0x4, fixed_abs, tag = 'smem constant byte address 0x4 - core index']
  #allocation1 [shape = 'u32[72,128]{1,0:T(1,128)}', space=vmem, size = 0x9000, scoped, tag = 'internal scratch']
  %s0 = inlined_call_operand.hbm [shape: f32[16,128], index: 0, kind: input, shape index: {}]
  %s1 = inlined_call_operand.hbm [shape: f32[128,256], index: 1, kind: input, shape index: {}]
  %s2 = inlined_call_operand.hbm [shape: f32[16,256], index: 2, kind: output, shape index: {}]
  %s3 = sld [smem:[#allocation0]]
  $region26: #{tpu_custom_call.1} parent=0
    _
  %s5 = ssub.s32 1, %s3
  %s6 = scalar_select 0, %s5, %s3
  $region1: #{tpu_custom_call.1} parent=0
    #allocation2 [shape = 'u8[8192]{0}', space=vmem, size = 0x2000, scoped, tag = 'input window, operand 0, single buffered']
    #allocation3 [shape = 's32[1]{0}', space=sflag, size = 0x4, scoped, tag = 'scoped memory for tpu_custom_call.1']
    #allocation4 [shape = 's32[1]{0}', space=sflag, size = 0x4, scoped, tag = 'scoped memory for tpu_custom_call.1']
    #allocation5 [shape = 'u8[131072]{0}', space=vmem, size = 0x20000, scoped, tag = 'input window, operand 1, single buffered']
    #allocation6 [shape = 's32[1]{0}', space=sflag, size = 0x4, scoped, tag = 'scoped memory for tpu_custom_call.1']
    #allocation7 [shape = 'u8[16384]{0}', space=vmem, size = 0x4000, scoped, tag = 'output window, operand 0, single buffered']
    %7 = vsyncpa [#allocation3], 0
    %8 = vsyncpa [#allocation6], 0
    %9 = vsyncpa [#allocation4], 0
    // Predicated region
    $region2: #{tpu_custom_call.1} parent=1 // pred_check
      _
    $region3: #{tpu_custom_call.1} parent=1 // pred_check_branch
      %11 = sbr.rel (0) target = $region5
    $region4: #{tpu_custom_call.1} parent=1 // pred_region
      %13 = vsyncadd [#allocation3], 0
      %s14 = sshll.u32 %s0, 4
      %s15 = int_to_ptr.hbm [resolvable:$true] %s14
      %s16 = sshll.u32 [#allocation2], 4
      %s17 = int_to_ptr.vmem [resolvable:$true] %s16
      %22 = dma.hbm_to_vmem [thread:$0]  %s15, 256, %s17, [#allocation3], 128, 128, 8
    $region5: #{tpu_custom_call.1} parent=1 // pred_fallthru
      _
    // Predicated region
    $region6: #{tpu_custom_call.1} parent=1 // pred_check
      _
    $region7: #{tpu_custom_call.1} parent=1 // pred_check_branch
      %24 = sbr.rel (0) target = $region9
    $region8: #{tpu_custom_call.1} parent=1 // pred_region
      %26 = vsyncadd [#allocation6], 0
      %s27 = sshll.u32 %s1, 4
      %s28 = int_to_ptr.hbm [resolvable:$true] %s27
      %s29 = sshll.u32 [#allocation5], 4
      %s30 = int_to_ptr.vmem [resolvable:$true] %s29
      %35 = dma.hbm_to_vmem [thread:$0]  %s28, 4096, %s30, [#allocation6], 256, 256, 16
    $region9: #{tpu_custom_call.1} parent=1 // pred_fallthru
      _
    // Predicated region
    $region10: #{tpu_custom_call.1} parent=1 // pred_check
      _
    $region11: #{tpu_custom_call.1} parent=1 // pred_check_branch
      %37 = sbr.rel (0) target = $region13
    $region12: #{tpu_custom_call.1} parent=1 // pred_region
      %39 = dma.done [#allocation3], 256
    $region13: #{tpu_custom_call.1} parent=1 // pred_fallthru
      _
    // Predicated region
    $region14: #{tpu_custom_call.1} parent=1 // pred_check
      _
    $region15: #{tpu_custom_call.1} parent=1 // pred_check_branch
      %41 = sbr.rel (0) target = $region17
    $region16: #{tpu_custom_call.1} parent=1 // pred_region
      %43 = dma.done [#allocation6], 4096
    $region17: #{tpu_custom_call.1} parent=1 // pred_fallthru
      _
    %v44 = vld [vmem:[#allocation2] sm:$0xff]
    %v45 = vld [vmem:[#allocation2 + $0x8] sm:$0xff]
    %v46 = vld [vmem:[#allocation5] sm:$0xff]
    %v47 = vld [vmem:[#allocation5 + $0x8] sm:$0xff]
    %v48 = vld [vmem:[#allocation5 + $0x10] sm:$0xff]
    %v49 = vld [vmem:[#allocation5 + $0x18] sm:$0xff]
    %v50 = vld [vmem:[#allocation5 + $0x20] sm:$0xff]
    %v51 = vld [vmem:[#allocation5 + $0x28] sm:$0xff]
    %v52 = vld [vmem:[#allocation5 + $0x30] sm:$0xff]
    %v53 = vld [vmem:[#allocation5 + $0x38] sm:$0xff]
    %v54 = vld [vmem:[#allocation5 + $0x40] sm:$0xff]
    %v55 = vld [vmem:[#allocation5 + $0x48] sm:$0xff]
    %v56 = vld [vmem:[#allocation5 + $0x50] sm:$0xff]
    %v57 = vld [vmem:[#allocation5 + $0x58] sm:$0xff]
    %v58 = vld [vmem:[#allocation5 + $0x60] sm:$0xff]
    %v59 = vld [vmem:[#allocation5 + $0x68] sm:$0xff]
    %v60 = vld [vmem:[#allocation5 + $0x70] sm:$0xff]
    %v61 = vld [vmem:[#allocation5 + $0x78] sm:$0xff]
    %v62 = vld [vmem:[#allocation5 + $0x80] sm:$0xff]
    %v63 = vld [vmem:[#allocation5 + $0x88] sm:$0xff]
    %v64 = vld [vmem:[#allocation5 + $0x90] sm:$0xff]
    %v65 = vld [vmem:[#allocation5 + $0x98] sm:$0xff]
    %v66 = vld [vmem:[#allocation5 + $0xa0] sm:$0xff]
    %v67 = vld [vmem:[#allocation5 + $0xa8] sm:$0xff]
    %v68 = vld [vmem:[#allocation5 + $0xb0] sm:$0xff]
    %v69 = vld [vmem:[#allocation5 + $0xb8] sm:$0xff]
    %v70 = vld [vmem:[#allocation5 + $0xc0] sm:$0xff]
    %v71 = vld [vmem:[#allocation5 + $0xc8] sm:$0xff]
    %v72 = vld [vmem:[#allocation5 + $0xd0] sm:$0xff]
    %v73 = vld [vmem:[#allocation5 + $0xd8] sm:$0xff]
    %v74 = vld [vmem:[#allocation5 + $0xe0] sm:$0xff]
    %v75 = vld [vmem:[#allocation5 + $0xe8] sm:$0xff]
    %v76 = vld [vmem:[#allocation5 + $0xf0] sm:$0xff]
    %v77 = vld [vmem:[#allocation5 + $0xf8] sm:$0xff]
    %78 = vmatpush.msra.mxu0 %v76
    %79 = vmatpush.msra.mxu0 %v74
    %80 = vmatpush.msra.mxu0 %v72
    %81 = vmatpush.msra.mxu0 %v70
    %82 = vmatpush.msra.mxu0 %v68
    %83 = vmatpush.msra.mxu0 %v66
    %84 = vmatpush.msra.mxu0 %v64
    %85 = vmatpush.msra.mxu0 %v62
    %86 = vmatpush.msra.mxu0 %v60
    %87 = vmatpush.msra.mxu0 %v58
    %88 = vmatpush.msra.mxu0 %v56
    %89 = vmatpush.msra.mxu0 %v54
    %90 = vmatpush.msra.mxu0 %v52
    %91 = vmatpush.msra.mxu0 %v50
    %92 = vmatpush.msra.mxu0 %v48
    %93 = vmatpush.msra.mxu0 %v46
    %94 = vmatmul.f32.gmra.mxu0 %v44
    %v95 = vpop.f32.mrf.mxu0
    %v96 = vadd.f32 0.0, %v95
    %97 = vmatmul.f32.gmra.mxu0 %v45
    %v98 = vpop.f32.mrf.mxu0
    %v99 = vadd.f32 0.0, %v98
    %100 = vdwg.mxu0
    %101 = vmatpush.msra.mxu0 %v77
    %102 = vmatpush.msra.mxu0 %v75
    %103 = vmatpush.msra.mxu0 %v73
    %104 = vmatpush.msra.mxu0 %v71
    %105 = vmatpush.msra.mxu0 %v69
    %106 = vmatpush.msra.mxu0 %v67
    %107 = vmatpush.msra.mxu0 %v65
    %108 = vmatpush.msra.mxu0 %v63
    %109 = vmatpush.msra.mxu0 %v61
    %110 = vmatpush.msra.mxu0 %v59
    %111 = vmatpush.msra.mxu0 %v57
    %112 = vmatpush.msra.mxu0 %v55
    %113 = vmatpush.msra.mxu0 %v53
    %114 = vmatpush.msra.mxu0 %v51
    %115 = vmatpush.msra.mxu0 %v49
    %116 = vmatpush.msra.mxu0 %v47
    %117 = vmatmul.f32.gmra.mxu0 %v44
    %v118 = vpop.f32.mrf.mxu0
    %v119 = vadd.f32 0.0, %v118
    %120 = vmatmul.f32.gmra.mxu0 %v45
    %v121 = vpop.f32.mrf.mxu0
    %v122 = vadd.f32 0.0, %v121
    %123 = vdwg.mxu0
    %124 = vst [vmem:[#allocation7] sm:$0xff] %v96
    %125 = vst [vmem:[#allocation7 + $0x8] sm:$0xff] %v119
    %126 = vst [vmem:[#allocation7 + $0x10] sm:$0xff] %v99
    %127 = vst [vmem:[#allocation7 + $0x18] sm:$0xff] %v122
    // Predicated region
    $region18: #{tpu_custom_call.1} parent=1 // pred_check
      _
    $region19: #{tpu_custom_call.1} parent=1 // pred_check_branch
      %129 = sbr.rel (0) target = $region21
    $region20: #{tpu_custom_call.1} parent=1 // pred_region
      %131 = vsyncadd [#allocation4], 0
      %s132 = sshll.u32 [#allocation7], 4
      %s133 = int_to_ptr.vmem [resolvable:$true] %s132
      %s134 = sshll.u32 %s2, 4
      %s135 = int_to_ptr.hbm [resolvable:$true] %s134
      %140 = dma.vmem_to_hbm [thread:$0]  %s133, 512, %s135, [#allocation4], 256, 256, 16
    $region21: #{tpu_custom_call.1} parent=1 // pred_fallthru
      _
    // Predicated region
    $region22: #{tpu_custom_call.1} parent=1 // pred_check
      _
    $region23: #{tpu_custom_call.1} parent=1 // pred_check_branch
      %142 = sbr.rel (0) target = $region25
    $region24: #{tpu_custom_call.1} parent=1 // pred_region
      %144 = dma.done [#allocation4], 512
    $region25: #{tpu_custom_call.1} parent=1 // pred_fallthru
      _
    %145 = vsyncpa [#allocation3], 1
    %146 = vsyncpa [#allocation6], 1
    %147 = vsyncpa [#allocation4], 1

</llo_original>
